<compile_context>
chip_gen: v7x
topology: tpu7x:2x2x1
jax: 0.10.0
libtpu: 0.0.40
codegen_flags: <defaults>
</compile_context>

<pallas_src>
import numpy as np
import jax
import jax.numpy as jnp
from jax.experimental import pallas as pl
from jax.experimental.pallas import tpu as pltpu


# ----------------------------------------------------------------------------
# Config (small, deterministic, synthetic)
# ----------------------------------------------------------------------------
B           = 2      # batch
PROPOSALS   = 8      # config.proposal_num
POSES       = 8      # config.num_poses
STATE       = 3      # self.state_size
D_MODEL     = 128    # config.tf_d_model
D_FFN       = 256    # config.tf_d_ffn
SEQ         = 80     # keyval sequence length (>= PROPOSALS * POSES)
OUT_DIM     = POSES * STATE        # 24 (logical output width)
OUT_PAD     = 128                  # lane-dense padded output width
B2D         = True   # config.b2d

M0 = B * PROPOSALS                 # 16 rows per branch
M  = 2 * M0                        # 32 rows total (both branches stacked)


# ----------------------------------------------------------------------------
# Fused kernel: build both feature blocks, run the MLP once on M=32.
# ----------------------------------------------------------------------------
def _fused_kernel(kv0_ref, emb_ref, kv1_ref, w1_ref, b1_ref, w2_ref, b2_ref, out_ref):
    # Branch A (init_p=True): proposal_feature = keyval + init_feature.weight[None]
    # (embedding arrives pre-broadcast to (B*P, D) -> plain shape-matched vadd)
    feat0 = kv0_ref[...] + emb_ref[...]                               # (16, 128) f32

    # Branch B (init_p=False, traj_bev=False):
    #   proposal_feature = keyval[:, :P*T].reshape(B, P, T, D).amax(-2)
    # kv1_ref is a (B, P*T, D) windowed block; flat row order of the reshape is identical.
    kv1 = kv1_ref[...].reshape(M0, POSES, D_MODEL)                    # (16, 8, 128)
    feat1 = jnp.max(kv1, axis=1)                                      # (16, 128) f32

    feat = jnp.concatenate([feat0, feat1], axis=0)                    # (32, 128)

    # MLP: Linear -> ReLU -> Linear.  bf16 operands on the MXU, f32 accumulate,
    # f32 biases / ReLU / output.  b2_ref already holds b2 + heading offset,
    # zero-padded to OUT_PAD lanes.
    h = jnp.dot(feat.astype(w1_ref.dtype), w1_ref[...],
                preferred_element_type=jnp.float32) + b1_ref[...]
    h = jnp.maximum(h, 0.0)
    out = jnp.dot(h.astype(w2_ref.dtype), w2_ref[...],
                  preferred_element_type=jnp.float32) + b2_ref[...]
    out_ref[...] = out.astype(out_ref.dtype)


# ----------------------------------------------------------------------------
# Wrapper: one pallas_call produces both refiner stages' proposals.
# ----------------------------------------------------------------------------
def traj_refiner_pair(keyval0, keyval1, params):
    """keyval0: (B, PROPOSALS, D_MODEL)  -> init_p branch.
       keyval1: (B, SEQ, D_MODEL)        -> amax/refine branch (first P*T tokens used).
    """
    kv0_flat = keyval0.reshape(M0, D_MODEL)   # metadata-only reshape on contiguous array

    flops = 2 * M * D_MODEL * D_FFN + 2 * M * D_FFN * OUT_PAD
    bytes_accessed = (
        2 * M0 * D_MODEL * 4                       # keyval0 + broadcast embedding (f32)
        + B * PROPOSALS * POSES * D_MODEL * 4      # keyval1 window (f32)
        + D_MODEL * D_FFN * 2 + D_FFN * 4          # w1 (bf16) + b1 (f32)
        + D_FFN * OUT_PAD * 2 + OUT_PAD * 4        # w2p (bf16) + b2off (f32)
        + M * OUT_PAD * 4                          # output (f32)
    )

    out = pl.pallas_call(
        _fused_kernel,
        out_shape=jax.ShapeDtypeStruct((M, OUT_PAD), jnp.float32),
        grid=(1,),
        in_specs=[
            pl.BlockSpec((M0, D_MODEL), lambda i: (0, 0)),                       # keyval0 (flat)
            pl.BlockSpec((M0, D_MODEL), lambda i: (0, 0)),                       # init_emb (pre-broadcast)
            pl.BlockSpec((B, PROPOSALS * POSES, D_MODEL), lambda i: (0, 0, 0)),  # keyval1 window (no XLA slice)
            pl.BlockSpec((D_MODEL, D_FFN), lambda i: (0, 0)),                    # w1 (bf16)
            pl.BlockSpec((1, D_FFN), lambda i: (0, 0)),                          # b1 (f32)
            pl.BlockSpec((D_FFN, OUT_PAD), lambda i: (0, 0)),                    # w2 padded (bf16)
            pl.BlockSpec((1, OUT_PAD), lambda i: (0, 0)),                        # b2 + heading offset (f32)
        ],
        out_specs=pl.BlockSpec((M, OUT_PAD), lambda i: (0, 0)),
        compiler_params=pltpu.CompilerParams(dimension_semantics=("arbitrary",)),
        cost_estimate=pl.CostEstimate(flops=flops, transcendentals=0,
                                      bytes_accessed=bytes_accessed),
    )(kv0_flat, params["init_emb_b"], keyval1,
      params["w1"], params["b1"], params["w2p"], params["b2off"])

    # Slice off the zero lanes and restore the module's output shape.
    # (Small XLA ops; at these sizes they should fuse with the consumer.)
    p0 = out[:M0, :OUT_DIM].reshape(B, PROPOSALS, POSES, STATE)
    p1 = out[M0:, :OUT_DIM].reshape(B, PROPOSALS, POSES, STATE)
    # keyval passes through unchanged in both translated branches (traj_bev=False).
    return (keyval0, keyval1), (p0, p1)


# ----------------------------------------------------------------------------
# Pure-JAX reference (uses the same bf16 weights, UNPADDED, to validate kernel
# math + padding/fused-bias logic)
# ----------------------------------------------------------------------------
def _mlp_ref(x, p):
    h = jnp.dot(x.astype(jnp.bfloat16), p["w1"],
                preferred_element_type=jnp.float32) + p["b1"][0]
    h = jnp.maximum(h, 0.0)
    y = jnp.dot(h.astype(jnp.bfloat16), p["w2b"],
                preferred_element_type=jnp.float32)
    return y + p["b2"][0] + p["off"][0]


def ref_init_p(keyval, p):
    feat = (keyval + p["init_emb"][None]).reshape(M0, D_MODEL)
    return _mlp_ref(feat, p).reshape(B, PROPOSALS, POSES, STATE)


def ref_refine(keyval, p):
    feat = keyval[:, :PROPOSALS * POSES].reshape(B, PROPOSALS, POSES, D_MODEL).max(-2)
    return _mlp_ref(feat.reshape(M0, D_MODEL), p).reshape(B, PROPOSALS, POSES, STATE)


# ----------------------------------------------------------------------------
# Deterministic parameter construction
# ----------------------------------------------------------------------------
def make_params(key):
    ks = jax.random.split(key, 5)
    off = np.zeros((1, OUT_DIM), np.float32)
    if B2D:
        off[0, 2::STATE] = np.pi / 2            # proposals[..., 2] += pi/2
    off = jnp.asarray(off)

    init_emb = jax.random.normal(ks[0], (PROPOSALS, D_MODEL), jnp.float32) * 0.02
    w1_f = jax.random.normal(ks[1], (D_MODEL, D_FFN), jnp.float32) * (1.0 / np.sqrt(D_MODEL))
    b1 = jax.random.normal(ks[2], (1, D_FFN), jnp.float32) * 0.01
    w2_f = jax.random.normal(ks[3], (D_FFN, OUT_DIM), jnp.float32) * (1.0 / np.sqrt(D_FFN))
    b2 = jax.random.normal(ks[4], (1, OUT_DIM), jnp.float32) * 0.01

    # bf16 MXU operands (halves weight DMA); lane-dense padded w2 / fused bias+offset.
    w1 = w1_f.astype(jnp.bfloat16)
    w2b = w2_f.astype(jnp.bfloat16)
    w2p = jnp.zeros((D_FFN, OUT_PAD), jnp.bfloat16).at[:, :OUT_DIM].set(w2b)
    b2off = jnp.zeros((1, OUT_PAD), jnp.float32).at[:, :OUT_DIM].set(b2 + off)
    init_emb_b = jnp.tile(init_emb, (B, 1))      # pre-broadcast to (B*PROPOSALS, D_MODEL)

    return {
        # kernel operands
        "init_emb_b": init_emb_b, "w1": w1, "b1": b1, "w2p": w2p, "b2off": b2off,
        # reference-only
        "init_emb": init_emb, "w2b": w2b, "b2": b2, "off": off,
    }


# ----------------------------------------------------------------------------
# Demo
# ----------------------------------------------------------------------------
if __name__ == "__main__":
    key = jax.random.PRNGKey(0)
    k_p, k_kv0, k_kv1 = jax.random.split(key, 3)
    params = make_params(k_p)

    # first refiner: init_p=True, keyval is (B, proposal_num, d_model)
    keyval0 = jax.random.normal(k_kv0, (B, PROPOSALS, D_MODEL), jnp.float32)
    # second refiner: init_p=False, traj_bev=False, full keyval sequence
    keyval1 = jax.random.normal(k_kv1, (B, SEQ, D_MODEL), jnp.float32)

    (kv0_out, kv1_out), (proposals0, proposals1) = traj_refiner_pair(keyval0, keyval1, params)
    proposal_list = [proposals0, proposals1]
    jax.block_until_ready((kv0_out, kv1_out, proposal_list))

    # correctness vs pure-JAX reference (same bf16 weights, f32 accumulation)
    np.testing.assert_allclose(np.asarray(proposals0), np.asarray(ref_init_p(keyval0, params)),
                               rtol=1e-4, atol=1e-4)
    np.testing.assert_allclose(np.asarray(proposals1), np.asarray(ref_refine(keyval1, params)),
                               rtol=1e-4, atol=1e-4)
    np.testing.assert_allclose(np.asarray(kv0_out), np.asarray(keyval0))
    np.testing.assert_allclose(np.asarray(kv1_out), np.asarray(keyval1))
    assert proposals0.shape == (B, PROPOSALS, POSES, STATE)
    assert proposals1.shape == (B, PROPOSALS, POSES, STATE)
    assert len(proposal_list) == 2

    print("KERNEL_OK")
</pallas_src>

<mosaic_0001>
module attributes {stable_mosaic.version = 11 : i64} {
  func.func @_fused_kernel(%arg0: i32, %arg1: memref<16x128xf32, #tpu.memory_space<vmem>>, %arg2: memref<16x128xf32, #tpu.memory_space<vmem>>, %arg3: memref<2x64x128xf32, #tpu.memory_space<vmem>>, %arg4: memref<128x256xbf16, #tpu.memory_space<vmem>>, %arg5: memref<1x256xf32, #tpu.memory_space<vmem>>, %arg6: memref<256x128xbf16, #tpu.memory_space<vmem>>, %arg7: memref<1x128xf32, #tpu.memory_space<vmem>>, %arg8: memref<32x128xf32, #tpu.memory_space<vmem>>) attributes {dimension_semantics = [#tpu.dimension_semantics<arbitrary>], iteration_bounds = array<i64: 1>, scalar_prefetch = 0 : i64, scratch_operands = 0 : i64, tpu.core_type = #tpu.core_type<tc>, window_params = [{pipeline_mode = #tpu.pipeline_mode<synchronous>, transform_indices = @transform_0, window_bounds = array<i64: 16, 128>}, {pipeline_mode = #tpu.pipeline_mode<synchronous>, transform_indices = @transform_1, window_bounds = array<i64: 16, 128>}, {transform_indices = @transform_2, window_bounds = array<i64: 2, 64, 128>}, {pipeline_mode = #tpu.pipeline_mode<synchronous>, transform_indices = @transform_3, window_bounds = array<i64: 128, 256>}, {pipeline_mode = #tpu.pipeline_mode<synchronous>, transform_indices = @transform_4, window_bounds = array<i64: 1, 256>}, {pipeline_mode = #tpu.pipeline_mode<synchronous>, transform_indices = @transform_5, window_bounds = array<i64: 256, 128>}, {pipeline_mode = #tpu.pipeline_mode<synchronous>, transform_indices = @transform_6, window_bounds = array<i64: 1, 128>}, {pipeline_mode = #tpu.pipeline_mode<synchronous>, transform_indices = @transform_7, window_bounds = array<i64: 32, 128>}]} {
    %c0 = arith.constant 0 : index
    %c0_0 = arith.constant 0 : index
    %0 = vector.load %arg1[%c0, %c0_0] : memref<16x128xf32, #tpu.memory_space<vmem>>, vector<16x128xf32>
    %c0_1 = arith.constant 0 : index
    %c0_2 = arith.constant 0 : index
    %1 = vector.load %arg2[%c0_1, %c0_2] : memref<16x128xf32, #tpu.memory_space<vmem>>, vector<16x128xf32>
    %2 = arith.addf %0, %1 : vector<16x128xf32>
    %c0_3 = arith.constant 0 : index
    %c0_4 = arith.constant 0 : index
    %c0_5 = arith.constant 0 : index
    %3 = vector.load %arg3[%c0_3, %c0_4, %c0_5] : memref<2x64x128xf32, #tpu.memory_space<vmem>>, vector<2x64x128xf32>
    %4 = vector.shape_cast %3 : vector<2x64x128xf32> to vector<16x8x128xf32>
    %cst = arith.constant dense<0xFF800000> : vector<16x128xf32>
    %5 = vector.multi_reduction <maximumf>, %4, %cst [1] : vector<16x8x128xf32> to vector<16x128xf32>
    %6 = tpu.concatenate %2, %5 in 0 : vector<16x128xf32>, vector<16x128xf32> -> vector<32x128xf32>
    %7 = arith.truncf %6 : vector<32x128xf32> to vector<32x128xbf16>
    %c0_6 = arith.constant 0 : index
    %c0_7 = arith.constant 0 : index
    %8 = vector.load %arg4[%c0_6, %c0_7] : memref<128x256xbf16, #tpu.memory_space<vmem>>, vector<128x256xbf16>
    %cst_8 = arith.constant dense<0.000000e+00> : vector<32x256xf32>
    %9 = tpu.matmul %7, %8, %cst_8 {dimension_numbers = #tpu.dot_dimension_numbers<[1], [0], [0], [1], [0, 0, 1, 1], [], []>} : vector<32x128xbf16>, vector<128x256xbf16>, vector<32x256xf32> -> vector<32x256xf32>
    %c0_9 = arith.constant 0 : index
    %c0_10 = arith.constant 0 : index
    %10 = vector.load %arg5[%c0_9, %c0_10] : memref<1x256xf32, #tpu.memory_space<vmem>>, vector<1x256xf32>
    %11 = vector.broadcast %10 : vector<1x256xf32> to vector<32x256xf32>
    %12 = arith.addf %9, %11 : vector<32x256xf32>
    %cst_11 = arith.constant 0.000000e+00 : f32
    %13 = vector.broadcast %cst_11 : f32 to vector<32x256xf32>
    %14 = arith.maximumf %12, %13 : vector<32x256xf32>
    %15 = arith.truncf %14 : vector<32x256xf32> to vector<32x256xbf16>
    %c0_12 = arith.constant 0 : index
    %c0_13 = arith.constant 0 : index
    %16 = vector.load %arg6[%c0_12, %c0_13] : memref<256x128xbf16, #tpu.memory_space<vmem>>, vector<256x128xbf16>
    %cst_14 = arith.constant dense<0.000000e+00> : vector<32x128xf32>
    %17 = tpu.matmul %15, %16, %cst_14 {dimension_numbers = #tpu.dot_dimension_numbers<[1], [0], [0], [1], [0, 0, 1, 1], [], []>} : vector<32x256xbf16>, vector<256x128xbf16>, vector<32x128xf32> -> vector<32x128xf32>
    %c0_15 = arith.constant 0 : index
    %c0_16 = arith.constant 0 : index
    %18 = vector.load %arg7[%c0_15, %c0_16] : memref<1x128xf32, #tpu.memory_space<vmem>>, vector<1x128xf32>
    %19 = vector.broadcast %18 : vector<1x128xf32> to vector<32x128xf32>
    %20 = arith.addf %17, %19 : vector<32x128xf32>
    %c0_17 = arith.constant 0 : index
    %c0_18 = arith.constant 0 : index
    %21 = vector.load %arg8[%c0_17, %c0_18] : memref<32x128xf32, #tpu.memory_space<vmem>>, vector<32x128xf32>
    tpu.vector_store %arg8[%c0_17, %c0_18], %20 {strides = array<i32>} : memref<32x128xf32, #tpu.memory_space<vmem>>, vector<32x128xf32>,
    return
  }
  func.func @transform_0(%arg0: i32) -> (i32, i32) {
    %c0_i32 = arith.constant 0 : i32
    %c0_i32_0 = arith.constant 0 : i32
    %c0_i32_1 = arith.constant 0 : i32
    return %c0_i32, %c0_i32_0 : i32, i32
  }
  func.func @transform_1(%arg0: i32) -> (i32, i32) {
    %c0_i32 = arith.constant 0 : i32
    %c0_i32_0 = arith.constant 0 : i32
    %c0_i32_1 = arith.constant 0 : i32
    return %c0_i32, %c0_i32_0 : i32, i32
  }
  func.func @transform_2(%arg0: i32) -> (i32, i32, i32) {
    %c0_i32 = arith.constant 0 : i32
    %c0_i32_0 = arith.constant 0 : i32
    %c0_i32_1 = arith.constant 0 : i32
    %c0_i32_2 = arith.constant 0 : i32
    return %c0_i32, %c0_i32_0, %c0_i32_1 : i32, i32, i32
  }
  func.func @transform_3(%arg0: i32) -> (i32, i32) {
    %c0_i32 = arith.constant 0 : i32
    %c0_i32_0 = arith.constant 0 : i32
    %c0_i32_1 = arith.constant 0 : i32
    return %c0_i32, %c0_i32_0 : i32, i32
  }
  func.func @transform_4(%arg0: i32) -> (i32, i32) {
    %c0_i32 = arith.constant 0 : i32
    %c0_i32_0 = arith.constant 0 : i32
    %c0_i32_1 = arith.constant 0 : i32
    return %c0_i32, %c0_i32_0 : i32, i32
  }
  func.func @transform_5(%arg0: i32) -> (i32, i32) {
    %c0_i32 = arith.constant 0 : i32
    %c0_i32_0 = arith.constant 0 : i32
    %c0_i32_1 = arith.constant 0 : i32
    return %c0_i32, %c0_i32_0 : i32, i32
  }
  func.func @transform_6(%arg0: i32) -> (i32, i32) {
    %c0_i32 = arith.constant 0 : i32
    %c0_i32_0 = arith.constant 0 : i32
    %c0_i32_1 = arith.constant 0 : i32
    return %c0_i32, %c0_i32_0 : i32, i32
  }
  func.func @transform_7(%arg0: i32) -> (i32, i32) {
    %c0_i32 = arith.constant 0 : i32
    %c0_i32_0 = arith.constant 0 : i32
    %c0_i32_1 = arith.constant 0 : i32
    return %c0_i32, %c0_i32_0 : i32, i32
  }
}

</mosaic_0001>

<llo_original>
// kernel: tpu_custom_call.1
$region0: #{tpu_custom_call.1}
  #allocation0 [shape = 'u32[]', space=smem, size = 0x4, offset = 0x4, fixed_abs, tag = 'smem constant byte address 0x4 - core index']
  #allocation1 [shape = 'u32[144,128]{1,0:T(1,128)}', space=vmem, size = 0x12000, scoped, tag = 'internal scratch']
  #allocation12 [shape = 's32[]', space=sflag, size = 0x4, offset = 0, fixed_abs, tag = 'sflag constant byte address 0x0 - dummy sync flag']
  %s0 = inlined_call_operand.hbm [shape: f32[16,128], index: 0, kind: input, shape index: {}]
  %s1 = inlined_call_operand.hbm [shape: f32[16,128], index: 1, kind: input, shape index: {}]
  %s2 = inlined_call_operand.hbm [shape: f32[2,80,128], index: 2, kind: input, shape index: {}]
  %s3 = inlined_call_operand.hbm [shape: bf16[128,256], index: 3, kind: input, shape index: {}]
  %s4 = inlined_call_operand.vmem [shape: f32[1,256], index: 4, kind: input, shape index: {}]
  %s5 = inlined_call_operand.hbm [shape: bf16[256,128], index: 5, kind: input, shape index: {}]
  %s6 = inlined_call_operand.vmem [shape: f32[1,128], index: 6, kind: input, shape index: {}]
  %s7 = inlined_call_operand.hbm [shape: f32[32,128], index: 7, kind: output, shape index: {}]
  %s8 = sld [smem:[#allocation0]]
  $region58: #{tpu_custom_call.1} parent=0
    _
  %s10 = ssub.s32 1, %s8
  %s11 = scalar_select 0, %s10, %s8
  $region1: #{tpu_custom_call.1} parent=0
    #allocation2 [shape = 'u8[8192]{0}', space=vmem, size = 0x2000, scoped, tag = 'input window, operand 0, single buffered']
    #allocation3 [shape = 's32[1]{0}', space=sflag, size = 0x4, scoped, tag = 'scoped memory for tpu_custom_call.1']
    #allocation4 [shape = 's32[1]{0}', space=sflag, size = 0x4, scoped, tag = 'scoped memory for tpu_custom_call.1']
    #allocation5 [shape = 'u8[8192]{0}', space=vmem, size = 0x2000, scoped, tag = 'input window, operand 1, single buffered']
    #allocation6 [shape = 's32[1]{0}', space=sflag, size = 0x4, scoped, tag = 'scoped memory for tpu_custom_call.1']
    #allocation7 [shape = 'u8[65536]{0}', space=vmem, size = 0x10000, scoped, tag = 'input window, operand 2, single buffered']
    #allocation8 [shape = 'u8[65536]{0}', space=vmem, size = 0x10000, scoped, tag = 'input window, operand 3, single buffered']
    #allocation9 [shape = 's32[1]{0}', space=sflag, size = 0x4, scoped, tag = 'scoped memory for tpu_custom_call.1']
    #allocation10 [shape = 'u8[65536]{0}', space=vmem, size = 0x10000, scoped, tag = 'input window, operand 5, single buffered']
    #allocation11 [shape = 'u8[16384]{0}', space=vmem, size = 0x4000, scoped, tag = 'output window, operand 0, single buffered']
    %12 = vsyncpa [#allocation3], 0
    %13 = vsyncpa [#allocation6], 0
    %14 = vsyncpa [#allocation9], 0
    %15 = vsyncpa [#allocation4], 0
    // Predicated region
    $region2: #{tpu_custom_call.1} parent=1 // pred_check
      _
    $region3: #{tpu_custom_call.1} parent=1 // pred_check_branch
      %17 = sbr.rel (0) target = $region5
    $region4: #{tpu_custom_call.1} parent=1 // pred_region
      %s19 = ssub.s32 256, 256
      %20 = vsyncadd [#allocation3], %s19
      %s21 = sshll.u32 [#allocation2], 4
      %s22 = int_to_ptr.vmem [resolvable:$true] %s21
      %27 = dma.hbm_to_vmem [thread:$0]  %s0, 256, %s22, [#allocation3], 128, 128, 8
    $region5: #{tpu_custom_call.1} parent=1 // pred_fallthru
      _
    // Predicated region
    $region6: #{tpu_custom_call.1} parent=1 // pred_check
      _
    $region7: #{tpu_custom_call.1} parent=1 // pred_check_branch
      %29 = sbr.rel (0) target = $region9
    $region8: #{tpu_custom_call.1} parent=1 // pred_region
      %s31 = ssub.s32 256, 256
      %32 = vsyncadd [#allocation6], %s31
      %s33 = sshll.u32 [#allocation5], 4
      %s34 = int_to_ptr.vmem [resolvable:$true] %s33
      %39 = dma.hbm_to_vmem [thread:$0]  %s1, 256, %s34, [#allocation6], 128, 128, 8
    $region9: #{tpu_custom_call.1} parent=1 // pred_fallthru
      _
    // Predicated region
    $region10: #{tpu_custom_call.1} parent=1 // pred_check
      _
    $region11: #{tpu_custom_call.1} parent=1 // pred_check_branch
      %41 = sbr.rel (0) target = $region13
    $region12: #{tpu_custom_call.1} parent=1 // pred_region
      #allocation13 [shape = 'u32[6]{0}', space=smem, size = 0x18, scoped, tag = 'DMA stride descriptor']
      %s43 = ssub.s32 2048, 2048
      %44 = vsyncadd [#allocation6], %s43
      %s46 = sshll.u32 1, 14
      %s47 = sxor.u32 4294967295, %s46
      %s49 = sld [smem:[#allocation0]]
      %s50 = sadd.s32 2, %s49
      %s52 = sshll.u32 7, 26
      %s53 = sxor.u32 4294967295, %s52
      %s54 = sand.u32 0, %s53
      %s55 = sshll.u32 %s50, 26
      %s56 = sor.u32 %s54, %s55
      %s57 = sshll.u32 [#allocation7], 4
      %s58 = int_to_ptr.vmem [resolvable:$true] %s57
      %64 = sst [smem:[#allocation13]] 1280
      %s65 = scalar_lea.smem [#allocation13], 1
      %66 = sst [smem:[%s65]] 1024
      %s67 = scalar_lea.smem [#allocation13], 2
      %68 = sst [smem:[%s67]] 8
      %s69 = scalar_lea.smem [#allocation13], 3
      %70 = sst [smem:[%s69]] 128
      %s71 = scalar_lea.smem [#allocation13], 4
      %72 = sst [smem:[%s71]] 128
      %s73 = scalar_lea.smem [#allocation13], 5
      %74 = sst [smem:[%s73]] 8
      %76 = dma.general %s2, 2048, %s58, [#allocation6], [#allocation12], [#allocation13], %s56, 0
    $region13: #{tpu_custom_call.1} parent=1 // pred_fallthru
      _
    // Predicated region
    $region14: #{tpu_custom_call.1} parent=1 // pred_check
      _
    $region15: #{tpu_custom_call.1} parent=1 // pred_check_branch
      %78 = sbr.rel (0) target = $region17
    $region16: #{tpu_custom_call.1} parent=1 // pred_region
      %s80 = ssub.s32 2048, 2048
      %81 = vsyncadd [#allocation9], %s80
      %s82 = sshll.u32 [#allocation8], 4
      %s83 = int_to_ptr.vmem [resolvable:$true] %s82
      %88 = dma.hbm_to_vmem [thread:$0]  %s3, 2048, %s83, [#allocation9], 128, 128, 8
    $region17: #{tpu_custom_call.1} parent=1 // pred_fallthru
      _
    // Predicated region
    $region18: #{tpu_custom_call.1} parent=1 // pred_check
      _
    $region19: #{tpu_custom_call.1} parent=1 // pred_check_branch
      %90 = sbr.rel (0) target = $region21
    $region20: #{tpu_custom_call.1} parent=1 // pred_region
      _
    $region21: #{tpu_custom_call.1} parent=1 // pred_fallthru
      _
    // Predicated region
    $region22: #{tpu_custom_call.1} parent=1 // pred_check
      _
    $region23: #{tpu_custom_call.1} parent=1 // pred_check_branch
      %92 = sbr.rel (0) target = $region25
    $region24: #{tpu_custom_call.1} parent=1 // pred_region
      %s94 = ssub.s32 2048, 2048
      %95 = vsyncadd [#allocation9], %s94
      %s96 = sshll.u32 [#allocation10], 4
      %s97 = int_to_ptr.vmem [resolvable:$true] %s96
      %102 = dma.hbm_to_vmem [thread:$0]  %s5, 2048, %s97, [#allocation9], 64, 64, 4
    $region25: #{tpu_custom_call.1} parent=1 // pred_fallthru
      _
    // Predicated region
    $region26: #{tpu_custom_call.1} parent=1 // pred_check
      _
    $region27: #{tpu_custom_call.1} parent=1 // pred_check_branch
      %104 = sbr.rel (0) target = $region29
    $region28: #{tpu_custom_call.1} parent=1 // pred_region
      _
    $region29: #{tpu_custom_call.1} parent=1 // pred_fallthru
      _
    // Predicated region
    $region30: #{tpu_custom_call.1} parent=1 // pred_check
      _
    $region31: #{tpu_custom_call.1} parent=1 // pred_check_branch
      %106 = sbr.rel (0) target = $region33
    $region32: #{tpu_custom_call.1} parent=1 // pred_region
      %107 = dma.done [#allocation3], 256
    $region33: #{tpu_custom_call.1} parent=1 // pred_fallthru
      _
    // Predicated region
    $region34: #{tpu_custom_call.1} parent=1 // pred_check
      _
    $region35: #{tpu_custom_call.1} parent=1 // pred_check_branch
      %109 = sbr.rel (0) target = $region37
    $region36: #{tpu_custom_call.1} parent=1 // pred_region
      %110 = dma.done [#allocation6], 256
    $region37: #{tpu_custom_call.1} parent=1 // pred_fallthru
      _
    // Predicated region
    $region38: #{tpu_custom_call.1} parent=1 // pred_check
      _
    $region39: #{tpu_custom_call.1} parent=1 // pred_check_branch
      %112 = sbr.rel (0) target = $region41
    $region40: #{tpu_custom_call.1} parent=1 // pred_region
      %113 = dma.done [#allocation6], 2048
    $region41: #{tpu_custom_call.1} parent=1 // pred_fallthru
      _
    // Predicated region
    $region42: #{tpu_custom_call.1} parent=1 // pred_check
      _
    $region43: #{tpu_custom_call.1} parent=1 // pred_check_branch
      %115 = sbr.rel (0) target = $region45
    $region44: #{tpu_custom_call.1} parent=1 // pred_region
      %116 = dma.done [#allocation9], 2048
    $region45: #{tpu_custom_call.1} parent=1 // pred_fallthru
      _
    // Predicated region
    $region46: #{tpu_custom_call.1} parent=1 // pred_check
      _
    $region47: #{tpu_custom_call.1} parent=1 // pred_check_branch
      %118 = sbr.rel (0) target = $region49
    $region48: #{tpu_custom_call.1} parent=1 // pred_region
      %119 = dma.done [#allocation9], 2048
    $region49: #{tpu_custom_call.1} parent=1 // pred_fallthru
      _
    %v121 = vld [vmem:[#allocation2] sm:$0xff]
    %v122 = vld [vmem:[#allocation2 + $0x8] sm:$0xff]
    %v123 = vld [vmem:[#allocation5] sm:$0xff]
    %v124 = vld [vmem:[#allocation5 + $0x8] sm:$0xff]
    %v125 = vadd.f32 %v121, %v123
    %v126 = vadd.f32 %v122, %v124
    %v127 = vld [vmem:[#allocation7] sm:$0xff]
    %v128 = vld [vmem:[#allocation7 + $0x8] sm:$0xff]
    %v129 = vld [vmem:[#allocation7 + $0x10] sm:$0xff]
    %v130 = vld [vmem:[#allocation7 + $0x18] sm:$0xff]
    %v131 = vld [vmem:[#allocation7 + $0x20] sm:$0xff]
    %v132 = vld [vmem:[#allocation7 + $0x28] sm:$0xff]
    %v133 = vld [vmem:[#allocation7 + $0x30] sm:$0xff]
    %v134 = vld [vmem:[#allocation7 + $0x38] sm:$0xff]
    %v135 = vld [vmem:[#allocation7 + $0x40] sm:$0xff]
    %v136 = vld [vmem:[#allocation7 + $0x48] sm:$0xff]
    %v137 = vld [vmem:[#allocation7 + $0x50] sm:$0xff]
    %v138 = vld [vmem:[#allocation7 + $0x58] sm:$0xff]
    %v139 = vld [vmem:[#allocation7 + $0x60] sm:$0xff]
    %v140 = vld [vmem:[#allocation7 + $0x68] sm:$0xff]
    %v141 = vld [vmem:[#allocation7 + $0x70] sm:$0xff]
    %v142 = vld [vmem:[#allocation7 + $0x78] sm:$0xff]
    %v143 = vrot.slane %v127, 4
    %v144 = vmax.f32 %v127, %v143
    %v145 = vrot.slane %v144, 2
    %v146 = vmax.f32 %v144, %v145
    %v147 = vrot.slane %v146, 1
    %v148 = vmax.f32 %v146, %v147
    %v149 = vrot.slane %v128, 4
    %v150 = vmax.f32 %v128, %v149
    %v151 = vrot.slane %v150, 2
    %v152 = vmax.f32 %v150, %v151
    %v153 = vrot.slane %v152, 1
    %v154 = vmax.f32 %v152, %v153
    %v155 = vrot.slane %v129, 4
    %v156 = vmax.f32 %v129, %v155
    %v157 = vrot.slane %v156, 2
    %v158 = vmax.f32 %v156, %v157
    %v159 = vrot.slane %v158, 1
    %v160 = vmax.f32 %v158, %v159
    %v161 = vrot.slane %v130, 4
    %v162 = vmax.f32 %v130, %v161
    %v163 = vrot.slane %v162, 2
    %v164 = vmax.f32 %v162, %v163
    %v165 = vrot.slane %v164, 1
    %v166 = vmax.f32 %v164, %v165
    %v167 = vrot.slane %v131, 4
    %v168 = vmax.f32 %v131, %v167
    %v169 = vrot.slane %v168, 2
    %v170 = vmax.f32 %v168, %v169
    %v171 = vrot.slane %v170, 1
    %v172 = vmax.f32 %v170, %v171
    %v173 = vrot.slane %v132, 4
    %v174 = vmax.f32 %v132, %v173
    %v175 = vrot.slane %v174, 2
    %v176 = vmax.f32 %v174, %v175
    %v177 = vrot.slane %v176, 1
    %v178 = vmax.f32 %v176, %v177
    %v179 = vrot.slane %v133, 4
    %v180 = vmax.f32 %v133, %v179
    %v181 = vrot.slane %v180, 2
    %v182 = vmax.f32 %v180, %v181
    %v183 = vrot.slane %v182, 1
    %v184 = vmax.f32 %v182, %v183
    %v185 = vrot.slane %v134, 4
    %v186 = vmax.f32 %v134, %v185
    %v187 = vrot.slane %v186, 2
    %v188 = vmax.f32 %v186, %v187
    %v189 = vrot.slane %v188, 1
    %v190 = vmax.f32 %v188, %v189
    %v191 = vrot.slane %v135, 4
    %v192 = vmax.f32 %v135, %v191
    %v193 = vrot.slane %v192, 2
    %v194 = vmax.f32 %v192, %v193
    %v195 = vrot.slane %v194, 1
    %v196 = vmax.f32 %v194, %v195
    %v197 = vrot.slane %v136, 4
    %v198 = vmax.f32 %v136, %v197
    %v199 = vrot.slane %v198, 2
    %v200 = vmax.f32 %v198, %v199
    %v201 = vrot.slane %v200, 1
    %v202 = vmax.f32 %v200, %v201
    %v203 = vrot.slane %v137, 4
    %v204 = vmax.f32 %v137, %v203
    %v205 = vrot.slane %v204, 2
    %v206 = vmax.f32 %v204, %v205
    %v207 = vrot.slane %v206, 1
    %v208 = vmax.f32 %v206, %v207
    %v209 = vrot.slane %v138, 4
    %v210 = vmax.f32 %v138, %v209
    %v211 = vrot.slane %v210, 2
    %v212 = vmax.f32 %v210, %v211
    %v213 = vrot.slane %v212, 1
    %v214 = vmax.f32 %v212, %v213
    %v215 = vrot.slane %v139, 4
    %v216 = vmax.f32 %v139, %v215
    %v217 = vrot.slane %v216, 2
    %v218 = vmax.f32 %v216, %v217
    %v219 = vrot.slane %v218, 1
    %v220 = vmax.f32 %v218, %v219
    %v221 = vrot.slane %v140, 4
    %v222 = vmax.f32 %v140, %v221
    %v223 = vrot.slane %v222, 2
    %v224 = vmax.f32 %v222, %v223
    %v225 = vrot.slane %v224, 1
    %v226 = vmax.f32 %v224, %v225
    %v227 = vrot.slane %v141, 4
    %v228 = vmax.f32 %v141, %v227
    %v229 = vrot.slane %v228, 2
    %v230 = vmax.f32 %v228, %v229
    %v231 = vrot.slane %v230, 1
    %v232 = vmax.f32 %v230, %v231
    %v233 = vrot.slane %v142, 4
    %v234 = vmax.f32 %v142, %v233
    %v235 = vrot.slane %v234, 2
    %v236 = vmax.f32 %v234, %v235
    %v237 = vrot.slane %v236, 1
    %v238 = vmax.f32 %v236, %v237
    %vm255 = vcmask 1041409
    %v256 = vsel %vm255, %v154, %v148
    %vm257 = vcmask 1042434
    %v258 = vsel %vm257, %v160, %v256
    %vm259 = vcmask 1043459
    %v260 = vsel %vm259, %v166, %v258
    %vm261 = vcmask 1044484
    %v262 = vsel %vm261, %v172, %v260
    %vm263 = vcmask 1045509
    %v264 = vsel %vm263, %v178, %v262
    %vm265 = vcmask 1046534
    %v266 = vsel %vm265, %v184, %v264
    %vm267 = vcmask 1047559
    %v268 = vsel %vm267, %v190, %v266
    %v269 = vsel %vm255, %v202, %v196
    %v270 = vsel %vm257, %v208, %v269
    %v271 = vsel %vm259, %v214, %v270
    %v272 = vsel %vm261, %v220, %v271
    %v273 = vsel %vm263, %v226, %v272
    %v274 = vsel %vm265, %v232, %v273
    %v275 = vsel %vm267, %v238, %v274
    %v278 = vpack.c.bf16 %v126, %v125
    %v279 = vpack.c.bf16 %v275, %v268
    %v280 = vld [vmem:[#allocation8] sm:$0xff]
    %v281 = vld [vmem:[#allocation8 + $0x8] sm:$0xff]
    %v282 = vld [vmem:[#allocation8 + $0x10] sm:$0xff]
    %v283 = vld [vmem:[#allocation8 + $0x18] sm:$0xff]
    %v284 = vld [vmem:[#allocation8 + $0x20] sm:$0xff]
    %v285 = vld [vmem:[#allocation8 + $0x28] sm:$0xff]
    %v286 = vld [vmem:[#allocation8 + $0x30] sm:$0xff]
    %v287 = vld [vmem:[#allocation8 + $0x38] sm:$0xff]
    %v288 = vld [vmem:[#allocation8 + $0x40] sm:$0xff]
    %v289 = vld [vmem:[#allocation8 + $0x48] sm:$0xff]
    %v290 = vld [vmem:[#allocation8 + $0x50] sm:$0xff]
    %v291 = vld [vmem:[#allocation8 + $0x58] sm:$0xff]
    %v292 = vld [vmem:[#allocation8 + $0x60] sm:$0xff]
    %v293 = vld [vmem:[#allocation8 + $0x68] sm:$0xff]
    %v294 = vld [vmem:[#allocation8 + $0x70] sm:$0xff]
    %v295 = vld [vmem:[#allocation8 + $0x78] sm:$0xff]
    %v296 = vld [vmem:[%s4] sm:$0x3]
    %v298 = vlaneseq
    %v299 = vshrl.u32 %v298, 7
    %v300 = vsub.s32 0, %v299
    %v301 = vrot.slane %v296, %v300
    %v302 = vlaneseq
    %v303 = vshrl.u32 %v302, 7
    %v304 = vsub.s32 1, %v303
    %v305 = vrot.slane %v296, %v304
    %v324 = vunpack.c.l.b16 %v280
    %v325 = vunpack.c.h.b16 %v280
    %v326 = vunpack.c.l.b16 %v281
    %v327 = vunpack.c.h.b16 %v281
    %v328 = vunpack.c.l.b16 %v282
    %v329 = vunpack.c.h.b16 %v282
    %v330 = vunpack.c.l.b16 %v283
    %v331 = vunpack.c.h.b16 %v283
    %v332 = vunpack.c.l.b16 %v284
    %v333 = vunpack.c.h.b16 %v284
    %v334 = vunpack.c.l.b16 %v285
    %v335 = vunpack.c.h.b16 %v285
    %v336 = vunpack.c.l.b16 %v286
    %v337 = vunpack.c.h.b16 %v286
    %v338 = vunpack.c.l.b16 %v287
    %v339 = vunpack.c.h.b16 %v287
    %v340 = vunpack.c.l.b16 %v288
    %v341 = vunpack.c.h.b16 %v288
    %v342 = vunpack.c.l.b16 %v289
    %v343 = vunpack.c.h.b16 %v289
    %v344 = vunpack.c.l.b16 %v290
    %v345 = vunpack.c.h.b16 %v290
    %v346 = vunpack.c.l.b16 %v291
    %v347 = vunpack.c.h.b16 %v291
    %v348 = vunpack.c.l.b16 %v292
    %v349 = vunpack.c.h.b16 %v292
    %v350 = vunpack.c.l.b16 %v293
    %v351 = vunpack.c.h.b16 %v293
    %v352 = vunpack.c.l.b16 %v294
    %v353 = vunpack.c.h.b16 %v294
    %v354 = vunpack.c.l.b16 %v295
    %v355 = vunpack.c.h.b16 %v295
    %v356 = vpack.c.b16 %v326, %v324
    %v357 = vpack.c.b16 %v327, %v325
    %v358 = vpack.c.b16 %v330, %v328
    %v359 = vpack.c.b16 %v331, %v329
    %v360 = vpack.c.b16 %v334, %v332
    %v361 = vpack.c.b16 %v335, %v333
    %v362 = vpack.c.b16 %v338, %v336
    %v363 = vpack.c.b16 %v339, %v337
    %v364 = vpack.c.b16 %v342, %v340
    %v365 = vpack.c.b16 %v343, %v341
    %v366 = vpack.c.b16 %v346, %v344
    %v367 = vpack.c.b16 %v347, %v345
    %v368 = vpack.c.b16 %v350, %v348
    %v369 = vpack.c.b16 %v351, %v349
    %v370 = vpack.c.b16 %v354, %v352
    %v371 = vpack.c.b16 %v355, %v353
    %388 = vmatprep.subr.bf16.mxu0 %v357
    %389 = vmatpush1.bf16.msra.mxu0 %v356
    %390 = vmatprep.subr.bf16.mxu0 %v359
    %391 = vmatpush1.bf16.msra.mxu0 %v358
    %392 = vmatprep.subr.bf16.mxu0 %v361
    %393 = vmatpush1.bf16.msra.mxu0 %v360
    %394 = vmatprep.subr.bf16.mxu0 %v363
    %395 = vmatpush1.bf16.msra.mxu0 %v362
    %396 = vmatprep.subr.bf16.mxu0 %v365
    %397 = vmatpush1.bf16.msra.mxu0 %v364
    %398 = vmatprep.subr.bf16.mxu0 %v367
    %399 = vmatpush1.bf16.msra.mxu0 %v366
    %400 = vmatprep.subr.bf16.mxu0 %v369
    %401 = vmatpush1.bf16.msra.mxu0 %v368
    %402 = vmatprep.subr.bf16.mxu0 %v371
    %403 = vmatpush1.bf16.msra.mxu0 %v370
    %404 = vmatprep.subr.bf16.mxu0 0
    %405 = vmatpush1.bf16.msra.mxu0 0
    %406 = vmatprep.subr.bf16.mxu0 0
    %407 = vmatpush1.bf16.msra.mxu0 0
    %408 = vmatprep.subr.bf16.mxu0 0
    %409 = vmatpush1.bf16.msra.mxu0 0
    %410 = vmatprep.subr.bf16.mxu0 0
    %411 = vmatpush1.bf16.msra.mxu0 0
    %412 = vmatprep.subr.bf16.mxu0 0
    %413 = vmatpush1.bf16.msra.mxu0 0
    %414 = vmatprep.subr.bf16.mxu0 0
    %415 = vmatpush1.bf16.msra.mxu0 0
    %416 = vmatprep.subr.bf16.mxu0 0
    %417 = vmatpush1.bf16.msra.mxu0 0
    %418 = vmatprep.subr.bf16.mxu0 0
    %419 = vmatpush1.bf16.msra.mxu0 0
    %420 = vmatprep.mubr.bf16.mxu0 0
    %421 = vmatmul.mubr.bf16.gmra.mrb[0].mxu0 %v278
    %v422 = vpop.f32.mrb[0].mxu0
    %v423 = vadd.f32 %v301, %v422
    %v424 = vpop.f32.mrb[0].mxu0
    %v425 = vadd.f32 %v305, %v424
    %v426 = vpop.f32.mrb[0].mxu0
    %v427 = vadd.f32 %v301, %v426
    %v428 = vpop.f32.mrb[0].mxu0
    %v429 = vadd.f32 %v305, %v428
    %430 = vmatprep.mubr.bf16.mxu0 0
    %431 = vmatmul.mubr.bf16.gmra.mrb[0].mxu0 %v279
    %v432 = vpop.f32.mrb[0].mxu0
    %v433 = vadd.f32 %v301, %v432
    %v434 = vpop.f32.mrb[0].mxu0
    %v435 = vadd.f32 %v305, %v434
    %v436 = vpop.f32.mrb[0].mxu0
    %v437 = vadd.f32 %v301, %v436
    %v438 = vpop.f32.mrb[0].mxu0
    %v439 = vadd.f32 %v305, %v438
    %440 = vdwg.mxu0
    %v441 = vmax.f32 %v423, 0.0
    %v442 = vmax.f32 %v425, 0.0
    %v443 = vmax.f32 %v427, 0.0
    %v444 = vmax.f32 %v429, 0.0
    %v445 = vmax.f32 %v433, 0.0
    %v446 = vmax.f32 %v435, 0.0
    %v447 = vmax.f32 %v437, 0.0
    %v448 = vmax.f32 %v439, 0.0
    %v449 = vpack.c.bf16 %v443, %v441
    %v450 = vpack.c.bf16 %v444, %v442
    %v451 = vpack.c.bf16 %v447, %v445
    %v452 = vpack.c.bf16 %v448, %v446
    %v453 = vld [vmem:[#allocation10] sm:$0xf]
    %v454 = vld [vmem:[#allocation10 + $0x4] sm:$0xf]
    %v455 = vld [vmem:[#allocation10 + $0x8] sm:$0xf]
    %v456 = vld [vmem:[#allocation10 + $0xc] sm:$0xf]
    %v457 = vld [vmem:[#allocation10 + $0x10] sm:$0xf]
    %v458 = vld [vmem:[#allocation10 + $0x14] sm:$0xf]
    %v459 = vld [vmem:[#allocation10 + $0x18] sm:$0xf]
    %v460 = vld [vmem:[#allocation10 + $0x1c] sm:$0xf]
    %v461 = vld [vmem:[#allocation10 + $0x20] sm:$0xf]
    %v462 = vld [vmem:[#allocation10 + $0x24] sm:$0xf]
    %v463 = vld [vmem:[#allocation10 + $0x28] sm:$0xf]
    %v464 = vld [vmem:[#allocation10 + $0x2c] sm:$0xf]
    %v465 = vld [vmem:[#allocation10 + $0x30] sm:$0xf]
    %v466 = vld [vmem:[#allocation10 + $0x34] sm:$0xf]
    %v467 = vld [vmem:[#allocation10 + $0x38] sm:$0xf]
    %v468 = vld [vmem:[#allocation10 + $0x3c] sm:$0xf]
    %v469 = vld [vmem:[#allocation10 + $0x40] sm:$0xf]
    %v470 = vld [vmem:[#allocation10 + $0x44] sm:$0xf]
    %v471 = vld [vmem:[#allocation10 + $0x48] sm:$0xf]
    %v472 = vld [vmem:[#allocation10 + $0x4c] sm:$0xf]
    %v473 = vld [vmem:[#allocation10 + $0x50] sm:$0xf]
    %v474 = vld [vmem:[#allocation10 + $0x54] sm:$0xf]
    %v475 = vld [vmem:[#allocation10 + $0x58] sm:$0xf]
    %v476 = vld [vmem:[#allocation10 + $0x5c] sm:$0xf]
    %v477 = vld [vmem:[#allocation10 + $0x60] sm:$0xf]
    %v478 = vld [vmem:[#allocation10 + $0x64] sm:$0xf]
    %v479 = vld [vmem:[#allocation10 + $0x68] sm:$0xf]
    %v480 = vld [vmem:[#allocation10 + $0x6c] sm:$0xf]
    %v481 = vld [vmem:[#allocation10 + $0x70] sm:$0xf]
    %v482 = vld [vmem:[#allocation10 + $0x74] sm:$0xf]
    %v483 = vld [vmem:[#allocation10 + $0x78] sm:$0xf]
    %v484 = vld [vmem:[#allocation10 + $0x7c] sm:$0xf]
    %v485 = vld [vmem:[%s6] sm:$0x1]
    %v487 = vlaneseq
    %v488 = vshrl.u32 %v487, 7
    %v489 = vsub.s32 0, %v488
    %v490 = vrot.slane %v485, %v489
    %v524 = vunpack.c.l.b16 %v453
    %v525 = vunpack.c.l.b16 %v454
    %v526 = vunpack.c.l.b16 %v455
    %v527 = vunpack.c.l.b16 %v456
    %v528 = vunpack.c.l.b16 %v457
    %v529 = vunpack.c.l.b16 %v458
    %v530 = vunpack.c.l.b16 %v459
    %v531 = vunpack.c.l.b16 %v460
    %v532 = vunpack.c.l.b16 %v461
    %v533 = vunpack.c.l.b16 %v462
    %v534 = vunpack.c.l.b16 %v463
    %v535 = vunpack.c.l.b16 %v464
    %v536 = vunpack.c.l.b16 %v465
    %v537 = vunpack.c.l.b16 %v466
    %v538 = vunpack.c.l.b16 %v467
    %v539 = vunpack.c.l.b16 %v468
    %v540 = vunpack.c.l.b16 %v469
    %v541 = vunpack.c.l.b16 %v470
    %v542 = vunpack.c.l.b16 %v471
    %v543 = vunpack.c.l.b16 %v472
    %v544 = vunpack.c.l.b16 %v473
    %v545 = vunpack.c.l.b16 %v474
    %v546 = vunpack.c.l.b16 %v475
    %v547 = vunpack.c.l.b16 %v476
    %v548 = vunpack.c.l.b16 %v477
    %v549 = vunpack.c.l.b16 %v478
    %v550 = vunpack.c.l.b16 %v479
    %v551 = vunpack.c.l.b16 %v480
    %v552 = vunpack.c.l.b16 %v481
    %v553 = vunpack.c.l.b16 %v482
    %v554 = vunpack.c.l.b16 %v483
    %v555 = vunpack.c.l.b16 %v484
    %v556 = vpack.c.b16 %v525, %v524
    %v557 = vpack.c.b16 %v527, %v526
    %v558 = vpack.c.b16 %v529, %v528
    %v559 = vpack.c.b16 %v531, %v530
    %v560 = vpack.c.b16 %v533, %v532
    %v561 = vpack.c.b16 %v535, %v534
    %v562 = vpack.c.b16 %v537, %v536
    %v563 = vpack.c.b16 %v539, %v538
    %v564 = vpack.c.b16 %v541, %v540
    %v565 = vpack.c.b16 %v543, %v542
    %v566 = vpack.c.b16 %v545, %v544
    %v567 = vpack.c.b16 %v547, %v546
    %v568 = vpack.c.b16 %v549, %v548
    %v569 = vpack.c.b16 %v551, %v550
    %v570 = vpack.c.b16 %v553, %v552
    %v571 = vpack.c.b16 %v555, %v554
    %588 = vmatprep.subr.bf16.mxu0 0
    %589 = vmatpush1.bf16.msra.mxu0 %v556
    %590 = vmatprep.subr.bf16.mxu0 0
    %591 = vmatpush1.bf16.msra.mxu0 %v557
    %592 = vmatprep.subr.bf16.mxu0 0
    %593 = vmatpush1.bf16.msra.mxu0 %v558
    %594 = vmatprep.subr.bf16.mxu0 0
    %595 = vmatpush1.bf16.msra.mxu0 %v559
    %596 = vmatprep.subr.bf16.mxu0 0
    %597 = vmatpush1.bf16.msra.mxu0 %v560
    %598 = vmatprep.subr.bf16.mxu0 0
    %599 = vmatpush1.bf16.msra.mxu0 %v561
    %600 = vmatprep.subr.bf16.mxu0 0
    %601 = vmatpush1.bf16.msra.mxu0 %v562
    %602 = vmatprep.subr.bf16.mxu0 0
    %603 = vmatpush1.bf16.msra.mxu0 %v563
    %604 = vmatprep.subr.bf16.mxu0 0
    %605 = vmatpush1.bf16.msra.mxu0 %v564
    %606 = vmatprep.subr.bf16.mxu0 0
    %607 = vmatpush1.bf16.msra.mxu0 %v565
    %608 = vmatprep.subr.bf16.mxu0 0
    %609 = vmatpush1.bf16.msra.mxu0 %v566
    %610 = vmatprep.subr.bf16.mxu0 0
    %611 = vmatpush1.bf16.msra.mxu0 %v567
    %612 = vmatprep.subr.bf16.mxu0 0
    %613 = vmatpush1.bf16.msra.mxu0 %v568
    %614 = vmatprep.subr.bf16.mxu0 0
    %615 = vmatpush1.bf16.msra.mxu0 %v569
    %616 = vmatprep.subr.bf16.mxu0 0
    %617 = vmatpush1.bf16.msra.mxu0 %v570
    %618 = vmatprep.subr.bf16.mxu0 0
    %619 = vmatpush1.bf16.msra.mxu0 %v571
    %620 = vmatprep.mubr.bf16.mxu0 %v450
    %621 = vmatmul.mubr.bf16.gmra.mrb[0].mxu0 %v449
    %v622 = vpop.f32.mrb[0].mxu0
    %v623 = vadd.f32 %v490, %v622
    %v624 = vpop.f32.mrb[0].mxu0
    %v625 = vpop.f32.mrb[0].mxu0
    %v626 = vadd.f32 %v490, %v625
    %v627 = vpop.f32.mrb[0].mxu0
    %628 = vmatprep.mubr.bf16.mxu0 %v452
    %629 = vmatmul.mubr.bf16.gmra.mrb[0].mxu0 %v451
    %v630 = vpop.f32.mrb[0].mxu0
    %v631 = vadd.f32 %v490, %v630
    %v632 = vpop.f32.mrb[0].mxu0
    %v633 = vpop.f32.mrb[0].mxu0
    %v634 = vadd.f32 %v490, %v633
    %v635 = vpop.f32.mrb[0].mxu0
    %636 = vdwg.mxu0
    %637 = vst [vmem:[#allocation11] sm:$0xff] %v623
    %638 = vst [vmem:[#allocation11 + $0x8] sm:$0xff] %v626
    %639 = vst [vmem:[#allocation11 + $0x10] sm:$0xff] %v631
    %640 = vst [vmem:[#allocation11 + $0x18] sm:$0xff] %v634
    // Predicated region
    $region50: #{tpu_custom_call.1} parent=1 // pred_check
      _
    $region51: #{tpu_custom_call.1} parent=1 // pred_check_branch
      %642 = sbr.rel (0) target = $region53
    $region52: #{tpu_custom_call.1} parent=1 // pred_region
      %s644 = ssub.s32 512, 512
      %645 = vsyncadd [#allocation4], %s644
      %s646 = sshll.u32 [#allocation11], 4
      %s647 = int_to_ptr.vmem [resolvable:$true] %s646
      %652 = dma.vmem_to_hbm [thread:$0]  %s647, 512, %s7, [#allocation4], 128, 128, 8
    $region53: #{tpu_custom_call.1} parent=1 // pred_fallthru
      _
    // Predicated region
    $region54: #{tpu_custom_call.1} parent=1 // pred_check
      _
    $region55: #{tpu_custom_call.1} parent=1 // pred_check_branch
      %654 = sbr.rel (0) target = $region57
    $region56: #{tpu_custom_call.1} parent=1 // pred_region
      %655 = dma.done [#allocation4], 512
    $region57: #{tpu_custom_call.1} parent=1 // pred_fallthru
      _
    %656 = vsyncpa [#allocation3], 1
    %657 = vsyncpa [#allocation6], 1
    %658 = vsyncpa [#allocation9], 1
    %659 = vsyncpa [#allocation4], 1

</llo_original>
